<compile_context>
chip_gen: v6e
topology: v6e:2x2x1
jax: 0.10.0
libtpu: 0.0.40
codegen_flags: <defaults>
</compile_context>

<pallas_src>
import jax
import jax.numpy as jnp
from jax.experimental import pallas as pl
from jax.experimental.pallas import tpu as pltpu


def _attention_kernel(x_ref, w_ref, out_ref, sc_ref):
    # x_ref : [TB, S, D] block of batch rows (native input dtype)
    # w_ref : [1, D]     projection weight row (f32, lane-dense, resident)
    # out_ref: [TB, D]   weighted output block
    # sc_ref : [TB, S]   softmax attention scores block
    x = x_ref[...].astype(jnp.float32)               # f32 compute (v5e has no bf16 VPU)
    w = w_ref[...]                                   # [1, D]

    # score projection: Linear(D, 1, bias=False) == lane reduce of x * w
    s = jnp.sum(x * w, axis=-1)                      # [TB, S]  (VPU mul + XLU lane reduce)

    # numerically-stable softmax over the sequence axis (torch dim=1)
    s_max = jnp.max(s, axis=1, keepdims=True)        # [TB, 1]
    e = jnp.exp(s - s_max)                           # [TB, S]  EUP
    denom = jnp.sum(e, axis=1, keepdims=True)        # [TB, 1]
    p = e * pl.reciprocal(denom, approx=True)        # EUP vrcp -> frees VALU slots

    # weighted sum over sequence: sum_s p[b,s] * x[b,s,d] -> [TB, D]
    weighted = jnp.sum(p[:, :, None] * x, axis=1)    # VPU mul + sublane reduce

    out_ref[...] = weighted.astype(out_ref.dtype)
    sc_ref[...] = p.astype(sc_ref.dtype)


def _tpu_config():
    """Generation-aware VMEM / tile budgets.

    v7x: 64 MiB VMEM per TC, 2 TensorCores per chip -> smaller blocks, lower
    vmem limit, and force >=2 grid blocks for megacore sharding.
    v5e/v6e: 128 MiB VMEM, single TC -> bigger blocks, higher limit."""
    vmem_cap = 128 << 20
    try:
        vmem_cap = int(pltpu.get_tpu_info().vmem_capacity_bytes)
    except Exception:
        pass
    kind = ""
    try:
        kind = jax.devices()[0].device_kind.lower().replace(" ", "")
    except Exception:
        pass
    is_v7x = ("v7" in kind) or ("tpu7" in kind) or (vmem_cap <= (64 << 20))
    if is_v7x:
        return dict(vmem_limit_bytes=48 << 20, target_block_bytes=8 << 20,
                    min_blocks=2)
    return dict(vmem_limit_bytes=100 << 20, target_block_bytes=16 << 20,
                min_blocks=1)


def _pick_tb(B, S, D, x_itemsize, *, target_block_bytes, vmem_limit_bytes,
             min_blocks=1):
    """Pick the batch tile.

    Aim for ~target_block_bytes of x per grid step, but gate it so the full
    per-step working set -- 2x double-buffered x block + ~2x f32 temporaries
    (x*w, exp, p[:, :, None]*x) + double-buffered output blocks -- stays under
    ~75% of the VMEM limit.  When min_blocks > 1 (v7x) cap tb so the batch
    grid has at least that many blocks (when B is large enough to keep the
    sublane-aligned multiple-of-8 tile)."""
    x_row_bytes = max(1, S * D * x_itemsize)
    row_working_set = 2 * x_row_bytes + 2 * S * D * 4 + 2 * (S + D) * 4
    tb = max(1, target_block_bytes // x_row_bytes)
    tb = min(tb, max(1, (vmem_limit_bytes * 3 // 4) // row_working_set))
    if min_blocks > 1 and B >= 8 * min_blocks:
        tb = min(tb, pl.cdiv(B, min_blocks))
    if tb >= B:
        return int(B)
    # multiple of 8 keeps the (tb, D)/(tb, S) output blocks sublane-aligned
    tb = max(8, (tb // 8) * 8)
    return int(min(tb, B))


def attention_forward(x, w, *, tb=None):
    """x: [B, S, D] (f32 or bf16), w: [1, D] (torch Linear(D,1) weight layout).

    Returns (weighted_output [B, D], attention_scores [B, S]) in x.dtype."""
    x = jnp.asarray(x)                       # keep caller dtype: no host upcast
    B, S, D = x.shape
    w_row = jnp.asarray(w, jnp.float32).reshape(1, D)

    cfg = _tpu_config()
    if tb is None:
        tb = _pick_tb(B, S, D, jnp.dtype(x.dtype).itemsize,
                      target_block_bytes=cfg["target_block_bytes"],
                      vmem_limit_bytes=cfg["vmem_limit_bytes"],
                      min_blocks=cfg["min_blocks"])
    grid = (pl.cdiv(B, tb),)
    # TODO(synk): for very long sequences (a tb=8 slab approaching ~half the
    # VMEM limit, i.e. S*D >~ 0.5-0.8M f32 on v7x) add an "arbitrary" S-chunk
    # grid axis with an online-softmax accumulator instead of one pass over S.

    out_dtype = x.dtype

    weighted, scores = pl.pallas_call(
        _attention_kernel,
        out_shape=(
            jax.ShapeDtypeStruct((B, D), out_dtype),
            jax.ShapeDtypeStruct((B, S), out_dtype),
        ),
        grid_spec=pltpu.PrefetchScalarGridSpec(
            num_scalar_prefetch=0,
            grid=grid,
            in_specs=[
                pl.BlockSpec((tb, S, D), lambda b: (b, 0, 0)),
                pl.BlockSpec((1, D), lambda b: (0, 0)),
            ],
            out_specs=[
                pl.BlockSpec((tb, D), lambda b: (b, 0)),
                pl.BlockSpec((tb, S), lambda b: (b, 0)),
            ],
        ),
        compiler_params=pltpu.CompilerParams(
            dimension_semantics=("parallel",),
            vmem_limit_bytes=cfg["vmem_limit_bytes"],
        ),
    )(x, w_row)

    return weighted, scores


def _reference(x, w):
    # pure-JAX reference mirroring the PyTorch forward
    xf = jnp.asarray(x, jnp.float32)
    scores = jnp.einsum("bsd,d->bs", xf, jnp.asarray(w, jnp.float32).reshape(-1))
    scores = jax.nn.softmax(scores, axis=1)
    weighted = jnp.einsum("bs,bsd->bd", scores, xf)
    return weighted, scores


if __name__ == "__main__":
    B, S, D = 2, 8, 32
    key = jax.random.PRNGKey(0)
    kx, kw = jax.random.split(key)

    x = jax.random.normal(kx, (B, S, D), dtype=jnp.float32)
    # deterministic init mimicking torch.nn.Linear default: U(-1/sqrt(D), 1/sqrt(D))
    bound = 1.0 / jnp.sqrt(jnp.float32(D))
    w = jax.random.uniform(kw, (1, D), minval=-bound, maxval=bound,
                           dtype=jnp.float32)

    weighted, scores = attention_forward(x, w)
    jax.block_until_ready((weighted, scores))

    ref_weighted, ref_scores = _reference(x, w)
    # tolerance loosened to cover the EUP approximate-reciprocal (~2^-12 rel err)
    assert jnp.allclose(weighted, ref_weighted, atol=2e-3, rtol=2e-3)
    assert jnp.allclose(scores, ref_scores, atol=2e-3, rtol=2e-3)

    print("KERNEL_OK")
</pallas_src>

<mosaic_0001>
module attributes {stable_mosaic.version = 11 : i64} {
  func.func @_attention_kernel(%arg0: i32, %arg1: memref<2x8x32xf32, #tpu.memory_space<vmem>>, %arg2: memref<1x32xf32, #tpu.memory_space<vmem>>, %arg3: memref<2x32xf32, #tpu.memory_space<vmem>>, %arg4: memref<2x8xf32, #tpu.memory_space<vmem>>) attributes {dimension_semantics = [#tpu.dimension_semantics<parallel>], iteration_bounds = array<i64: 1>, scalar_prefetch = 0 : i64, scratch_operands = 0 : i64, tpu.core_type = #tpu.core_type<tc>, window_params = [{transform_indices = @transform_0, window_bounds = array<i64: 2, 8, 32>}, {pipeline_mode = #tpu.pipeline_mode<synchronous>, transform_indices = @transform_1, window_bounds = array<i64: 1, 32>}, {transform_indices = @transform_2, window_bounds = array<i64: 2, 32>}, {transform_indices = @transform_3, window_bounds = array<i64: 2, 8>}]} {
    %c0 = arith.constant 0 : index
    %c0_0 = arith.constant 0 : index
    %c0_1 = arith.constant 0 : index
    %0 = vector.load %arg1[%c0, %c0_0, %c0_1] : memref<2x8x32xf32, #tpu.memory_space<vmem>>, vector<2x8x32xf32>
    %c0_2 = arith.constant 0 : index
    %c0_3 = arith.constant 0 : index
    %1 = vector.load %arg2[%c0_2, %c0_3] : memref<1x32xf32, #tpu.memory_space<vmem>>, vector<1x32xf32>
    %2 = vector.shape_cast %1 : vector<1x32xf32> to vector<1x1x32xf32>
    %3 = vector.broadcast %2 : vector<1x1x32xf32> to vector<2x8x32xf32>
    %4 = arith.mulf %0, %3 : vector<2x8x32xf32>
    %cst = arith.constant dense<0.000000e+00> : vector<2x8xf32>
    %5 = vector.multi_reduction <add>, %4, %cst [2] : vector<2x8x32xf32> to vector<2x8xf32>
    %cst_4 = arith.constant dense<0xFF800000> : vector<2xf32>
    %6 = vector.multi_reduction <maximumf>, %5, %cst_4 [1] : vector<2x8xf32> to vector<2xf32>
    %7 = vector.shape_cast %6 : vector<2xf32> to vector<2x1xf32>
    %8 = vector.broadcast %7 : vector<2x1xf32> to vector<2x8xf32>
    %9 = arith.subf %5, %8 : vector<2x8xf32>
    %10 = math.exp %9 : vector<2x8xf32>
    %cst_5 = arith.constant dense<0.000000e+00> : vector<2xf32>
    %11 = vector.multi_reduction <add>, %10, %cst_5 [1] : vector<2x8xf32> to vector<2xf32>
    %12 = vector.shape_cast %11 : vector<2xf32> to vector<2x1xf32>
    %13 = tpu.reciprocal %12 {approx = true} : vector<2x1xf32> -> vector<2x1xf32>
    %14 = vector.broadcast %13 : vector<2x1xf32> to vector<2x8xf32>
    %15 = arith.mulf %10, %14 : vector<2x8xf32>
    %16 = vector.shape_cast %15 : vector<2x8xf32> to vector<2x8x1xf32>
    %17 = vector.broadcast %16 : vector<2x8x1xf32> to vector<2x8x32xf32>
    %18 = arith.mulf %17, %0 : vector<2x8x32xf32>
    %cst_6 = arith.constant dense<0.000000e+00> : vector<2x32xf32>
    %19 = vector.multi_reduction <add>, %18, %cst_6 [1] : vector<2x8x32xf32> to vector<2x32xf32>
    %c0_7 = arith.constant 0 : index
    %c0_8 = arith.constant 0 : index
    %20 = vector.load %arg3[%c0_7, %c0_8] : memref<2x32xf32, #tpu.memory_space<vmem>>, vector<2x32xf32>
    tpu.vector_store %arg3[%c0_7, %c0_8], %19 {strides = array<i32>} : memref<2x32xf32, #tpu.memory_space<vmem>>, vector<2x32xf32>,
    %c0_9 = arith.constant 0 : index
    %c0_10 = arith.constant 0 : index
    %21 = vector.load %arg4[%c0_9, %c0_10] : memref<2x8xf32, #tpu.memory_space<vmem>>, vector<2x8xf32>
    tpu.vector_store %arg4[%c0_9, %c0_10], %15 {strides = array<i32>} : memref<2x8xf32, #tpu.memory_space<vmem>>, vector<2x8xf32>,
    return
  }
  func.func @transform_0(%arg0: i32) -> (i32, i32, i32) {
    %c0_i32 = arith.constant 0 : i32
    %c0_i32_0 = arith.constant 0 : i32
    %c0_i32_1 = arith.constant 0 : i32
    return %arg0, %c0_i32, %c0_i32_0 : i32, i32, i32
  }
  func.func @transform_1(%arg0: i32) -> (i32, i32) {
    %c0_i32 = arith.constant 0 : i32
    %c0_i32_0 = arith.constant 0 : i32
    %c0_i32_1 = arith.constant 0 : i32
    return %c0_i32, %c0_i32_0 : i32, i32
  }
  func.func @transform_2(%arg0: i32) -> (i32, i32) {
    %c0_i32 = arith.constant 0 : i32
    %c0_i32_0 = arith.constant 0 : i32
    return %arg0, %c0_i32 : i32, i32
  }
  func.func @transform_3(%arg0: i32) -> (i32, i32) {
    %c0_i32 = arith.constant 0 : i32
    %c0_i32_0 = arith.constant 0 : i32
    return %arg0, %c0_i32 : i32, i32
  }
}

</mosaic_0001>

<llo_original>
// kernel: tpu_custom_call.1
$region0: #{tpu_custom_call.1}
  #allocation0 [shape = 'u32[]', space=smem, size = 0x4, offset = 0x4, fixed_abs, tag = 'smem constant byte address 0x4 - core index']
  #allocation1 [shape = 'u32[144,128]{1,0:T(1,128)}', space=vmem, size = 0x12000, scoped, tag = 'internal scratch']
  %s0 = inlined_call_operand.hbm [shape: f32[2,8,32], index: 0, kind: input, shape index: {}]
  %s1 = inlined_call_operand.vmem [shape: f32[1,32], index: 1, kind: input, shape index: {}]
  %s2 = inlined_call_operand.hbm [shape: f32[2,32], index: 2, kind: output, shape index: {0}]
  %s3 = inlined_call_operand.hbm [shape: f32[2,8], index: 3, kind: output, shape index: {1}]
  %4 = xla_tuple %s2, %s3
  %s5 = sld [smem:[#allocation0]]
  $region30: #{tpu_custom_call.1} parent=0
    _
  %s7 = ssub.s32 1, %s5
  %s8 = scalar_select 0, %s7, %s5
  $region1: #{tpu_custom_call.1} parent=0
    #allocation2 [shape = 'u8[8192]{0}', space=vmem, size = 0x2000, scoped, tag = 'input window, operand 0, single buffered']
    #allocation3 [shape = 's32[1]{0}', space=sflag, size = 0x4, scoped, tag = 'scoped memory for tpu_custom_call.1']
    #allocation4 [shape = 's32[1]{0}', space=sflag, size = 0x4, scoped, tag = 'scoped memory for tpu_custom_call.1']
    #allocation5 [shape = 'u8[1024]{0}', space=vmem, size = 0x400, scoped, tag = 'output window, operand 0, single buffered']
    #allocation6 [shape = 'u8[1024]{0}', space=vmem, size = 0x400, scoped, tag = 'output window, operand 1, single buffered']
    #allocation7 [shape = 's32[1]{0}', space=sflag, size = 0x4, scoped, tag = 'scoped memory for tpu_custom_call.1']
    %9 = vsyncpa [#allocation3], 0
    %10 = vsyncpa [#allocation4], 0
    %11 = vsyncpa [#allocation7], 0
    // Predicated region
    $region2: #{tpu_custom_call.1} parent=1 // pred_check
      _
    $region3: #{tpu_custom_call.1} parent=1 // pred_check_branch
      %13 = sbr.rel (0) target = $region5
    $region4: #{tpu_custom_call.1} parent=1 // pred_region
      %s15 = ssub.s32 256, 256
      %16 = vsyncadd [#allocation3], %s15
      %s17 = sshll.u32 [#allocation2], 4
      %s18 = int_to_ptr.vmem [resolvable:$true] %s17
      %23 = dma.hbm_to_vmem [thread:$0]  %s0, 256, %s18, [#allocation3], 128, 128, 8
    $region5: #{tpu_custom_call.1} parent=1 // pred_fallthru
      _
    // Predicated region
    $region6: #{tpu_custom_call.1} parent=1 // pred_check
      _
    $region7: #{tpu_custom_call.1} parent=1 // pred_check_branch
      %25 = sbr.rel (0) target = $region9
    $region8: #{tpu_custom_call.1} parent=1 // pred_region
      _
    $region9: #{tpu_custom_call.1} parent=1 // pred_fallthru
      _
    // Predicated region
    $region10: #{tpu_custom_call.1} parent=1 // pred_check
      _
    $region11: #{tpu_custom_call.1} parent=1 // pred_check_branch
      %27 = sbr.rel (0) target = $region13
    $region12: #{tpu_custom_call.1} parent=1 // pred_region
      %28 = dma.done [#allocation3], 256
    $region13: #{tpu_custom_call.1} parent=1 // pred_fallthru
      _
    %v29 = vld [vmem:[#allocation2] sm:$0xff]
    %v30 = vld [vmem:[#allocation2 + $0x8] sm:$0xff]
    %v31 = vld [vmem:[%s1] sm:$0x1]
    %v33 = vlaneseq
    %v34 = vshrl.u32 %v33, 7
    %v35 = vsub.s32 0, %v34
    %v36 = vrot.slane %v31, %v35
    %v38 = vmul.f32 %v29, %v36
    %v39 = vmul.f32 %v30, %v36
    %vm40 = vcmask 261120
    %v41 = vsel %vm40, %v38, 0.0
    %42 = vadd.xlane.f32.xlu0 %v41
    %v43 = vpop.xlane.xlu0 %42
    %v44 = vsel %vm40, %v39, 0.0
    %45 = vadd.xlane.f32.xlu0 %v44
    %v46 = vpop.xlane.xlu0 %45
    %v49 = vlaneseq
    %v50 = vand.u32 %v49, 127
    %v51 = vlaneseq
    %v52 = vshrl.u32 %v51, 7
    %v53 = vsub.s32 %v50, %v52
    %v54 = vrot.slane %v43, %v53
    %v55 = vlaneseq
    %v56 = vshrl.u32 %v55, 7
    %v57 = vsub.s32 %v50, %v56
    %v58 = vrot.slane %v46, %v57
    %vm59 = vcmask 1041409
    %v60 = vsel %vm59, %v58, %v54
    %vm62 = vcmask 58368
    %v63 = vsel %vm62, %v60, -inf
    %64 = vmax.xlane.f32.xlu0 %v63
    %v65 = vpop.xlane.xlu0 %64
    %v67 = vlaneseq
    %v68 = vshrl.u32 %v67, 7
    %v69 = vsub.s32 0, %v68
    %v70 = vrot.slane %v65, %v69
    %v71 = vlaneseq
    %v72 = vshrl.u32 %v71, 7
    %v73 = vsub.s32 1, %v72
    %v74 = vrot.slane %v65, %v73
    %v77 = vsub.f32 %v43, %v70
    %v78 = vsub.f32 %v46, %v74
    %v79 = vmul.f32 %v77, 1.442695
    %v80 = vpow.pop %v79
    %v81 = vmul.f32 %v78, 1.442695
    %v82 = vpow.pop %v81
    %85 = vset.pattern.permute.xlu0 0
    %86 = vperm.xlu0 %85, %v80
    %v87 = vpop.permute.xlu0 %86
    %88 = vset.pattern.permute.xlu0 0
    %89 = vperm.xlu0 %88, %v82
    %v90 = vpop.permute.xlu0 %89
    %v91 = vlaneseq
    %v92 = vshrl.u32 %v91, 7
    %v93 = vsub.s32 %v50, %v92
    %v94 = vrot.slane %v87, %v93
    %v95 = vlaneseq
    %v96 = vshrl.u32 %v95, 7
    %v97 = vsub.s32 %v50, %v96
    %v98 = vrot.slane %v90, %v97
    %v99 = vsel %vm59, %v98, %v94
    %v101 = vsel %vm62, %v99, 0.0
    %102 = vadd.xlane.f32.xlu0 %v101
    %v103 = vpop.xlane.xlu0 %102
    %v104 = vrcp.pop %v103
    %v106 = vlaneseq
    %v107 = vshrl.u32 %v106, 7
    %v108 = vsub.s32 0, %v107
    %v109 = vrot.slane %v104, %v108
    %v110 = vlaneseq
    %v111 = vshrl.u32 %v110, 7
    %v112 = vsub.s32 1, %v111
    %v113 = vrot.slane %v104, %v112
    %v116 = vmul.f32 %v80, %v109
    %v117 = vmul.f32 %v82, %v113
    %119 = vset.pattern.permute.xlu0 0
    %120 = vperm.xlu0 %119, %v116
    %v121 = vpop.permute.xlu0 %120
    %124 = vset.pattern.permute.xlu0 0
    %125 = vperm.xlu0 %124, %v117
    %v126 = vpop.permute.xlu0 %125
    %v128 = vmul.f32 %v121, %v29
    %v129 = vmul.f32 %v126, %v30
    %v130 = vsel %vm40, %v128, 0.0
    %v131 = vrot.slane %v130, 4
    %v132 = vadd.f32 %v130, %v131
    %v133 = vrot.slane %v132, 2
    %v134 = vadd.f32 %v132, %v133
    %v135 = vrot.slane %v134, 1
    %v136 = vadd.f32 %v134, %v135
    %v137 = vsel %vm40, %v129, 0.0
    %v138 = vrot.slane %v137, 4
    %v139 = vadd.f32 %v137, %v138
    %v140 = vrot.slane %v139, 2
    %v141 = vadd.f32 %v139, %v140
    %v142 = vrot.slane %v141, 1
    %v143 = vadd.f32 %v141, %v142
    %v146 = vsel %vm59, %v143, %v136
    %vm148 = vcmask 254976
    %149 = vst.msk [vmem:[#allocation5] sm:$0x3] %vm148, %v146
    %v150 = vlaneseq
    %v151 = vshrl.u32 %v150, 7
    %v152 = vsub.s32 %v50, %v151
    %v153 = vrot.slane %v121, %v152
    %v154 = vlaneseq
    %v155 = vshrl.u32 %v154, 7
    %v156 = vsub.s32 %v50, %v155
    %v157 = vrot.slane %v126, %v156
    %v158 = vsel %vm59, %v157, %v153
    %160 = vst.msk [vmem:[#allocation6] sm:$0x3] %vm62, %v158
    // Predicated region
    $region14: #{tpu_custom_call.1} parent=1 // pred_check
      _
    $region15: #{tpu_custom_call.1} parent=1 // pred_check_branch
      %162 = sbr.rel (0) target = $region17
    $region16: #{tpu_custom_call.1} parent=1 // pred_region
      %s164 = ssub.s32 32, 32
      %165 = vsyncadd [#allocation4], %s164
      %s167 = sshll.u32 [#allocation5], 4
      %s168 = int_to_ptr.vmem [resolvable:$true] %s167
      %170 = dma.vmem_to_hbm [thread:$0]  %s168, 32, %s2, [#allocation4]
    $region17: #{tpu_custom_call.1} parent=1 // pred_fallthru
      _
    // Predicated region
    $region18: #{tpu_custom_call.1} parent=1 // pred_check
      _
    $region19: #{tpu_custom_call.1} parent=1 // pred_check_branch
      %172 = sbr.rel (0) target = $region21
    $region20: #{tpu_custom_call.1} parent=1 // pred_region
      %s174 = ssub.s32 32, 32
      %175 = vsyncadd [#allocation7], %s174
      %s177 = sshll.u32 [#allocation6], 4
      %s178 = int_to_ptr.vmem [resolvable:$true] %s177
      %180 = dma.vmem_to_hbm [thread:$0]  %s178, 32, %s3, [#allocation7]
    $region21: #{tpu_custom_call.1} parent=1 // pred_fallthru
      _
    // Predicated region
    $region22: #{tpu_custom_call.1} parent=1 // pred_check
      _
    $region23: #{tpu_custom_call.1} parent=1 // pred_check_branch
      %182 = sbr.rel (0) target = $region25
    $region24: #{tpu_custom_call.1} parent=1 // pred_region
      %183 = dma.done [#allocation4], 32
    $region25: #{tpu_custom_call.1} parent=1 // pred_fallthru
      _
    // Predicated region
    $region26: #{tpu_custom_call.1} parent=1 // pred_check
      _
    $region27: #{tpu_custom_call.1} parent=1 // pred_check_branch
      %185 = sbr.rel (0) target = $region29
    $region28: #{tpu_custom_call.1} parent=1 // pred_region
      %186 = dma.done [#allocation7], 32
    $region29: #{tpu_custom_call.1} parent=1 // pred_fallthru
      _
    %187 = vsyncpa [#allocation3], 1
    %188 = vsyncpa [#allocation4], 1
    %189 = vsyncpa [#allocation7], 1

</llo_original>
